<compile_context>
chip_gen: v6e
topology: v6e:2x2x1
jax: 0.10.0
libtpu: 0.0.40
codegen_flags: <defaults>
</compile_context>

<pallas_src>
import functools

import jax
import jax.numpy as jnp
from jax.experimental import pallas as pl
from jax.experimental.pallas import tpu as pltpu

EPS = 1e-5


# ---------------------------------------------------------------------------
# Generation-aware VMEM budgets.
# ---------------------------------------------------------------------------
def _vmem_budgets():
    """Returns (vmem_limit_bytes, target_block_bytes) for this TPU generation."""
    try:
        cap = int(pltpu.get_tpu_info().vmem_capacity_bytes)
    except Exception:
        cap = 64 * 1024 * 1024  # conservative fallback (v7x per-TC VMEM)
    limit = min((cap * 3) // 4, 96 * 1024 * 1024)  # 48 MiB (v7x) / 96 MiB (v5e/v6e)
    # Phase kernels hold ~4 live block-sized buffers (x x2 + scratch/out x2).
    target_block = max(4 * 1024 * 1024, min(16 * 1024 * 1024, limit // 6))
    return limit, target_block


def _choose_tile_hw(hw, c, target_block_bytes, elem_bytes=4):
    """Largest lane tile (multiple of 128, or full extent) within the block budget."""
    if hw <= 128 or hw * c * elem_bytes <= target_block_bytes:
        return hw
    thw = (target_block_bytes // (c * elem_bytes)) // 128 * 128
    return int(max(128, min(thw, hw)))


# ---------------------------------------------------------------------------
# Fused single-pass kernel (small activations: everything resident in VMEM).
# ---------------------------------------------------------------------------
def _fused_kernel(x_ref, w_ref, gamma_ref, beta_ref, o_ref, *, eps, count):
    # x_ref: (N, C, HW), w_ref: (C, C), gamma/beta: (C, 1), o_ref: (N, C, HW)
    x = x_ref[...]
    xf = x.astype(jnp.float32)
    w = w_ref[...]
    # 1x1 conv per image: (C, C) contracted with (N, C, HW) over channels.
    y = jnp.einsum('oc,nch->noh', w, xf, preferred_element_type=jnp.float32)

    # Per-channel batch statistics over (N, HW).
    y_sum_n = jnp.sum(y, axis=0)                       # (C, HW)
    y2_sum_n = jnp.sum(y * y, axis=0)                  # (C, HW)
    s1 = jnp.sum(y_sum_n, axis=1, keepdims=True)       # (C, 1)
    s2 = jnp.sum(y2_sum_n, axis=1, keepdims=True)      # (C, 1)
    mean = s1 / count
    var = s2 / count - mean * mean                     # biased (training-mode BN)
    scale = gamma_ref[...] * jax.lax.rsqrt(var + eps)  # (C, 1)
    shift = beta_ref[...] - mean * scale               # (C, 1)

    out = jnp.maximum(y * scale[None] + shift[None], 0.0) + xf
    o_ref[...] = out.astype(o_ref.dtype)


# ---------------------------------------------------------------------------
# Phase 1: per-channel sum / sum-of-squares of the conv output.
# Per-image output slabs (race-free under "parallel" N); full-width scratch
# accumulation, cross-lane reduce + narrow store only at the last tile.
# ---------------------------------------------------------------------------
def _stats_kernel(x_ref, w_ref, sums_ref, s1_ref, s2_ref, *, hw, tile_hw):
    # x_ref: (C, tile_hw), w_ref: (C, C), sums_ref: (C, 2) per-image slab,
    # s1_ref/s2_ref: (C, tile_hw) VMEM scratch (per-core).
    t = pl.program_id(1)

    @pl.when(t == 0)
    def _init():
        s1_ref[...] = jnp.zeros_like(s1_ref)
        s2_ref[...] = jnp.zeros_like(s2_ref)

    xf = x_ref[...].astype(jnp.float32)
    y = jnp.dot(w_ref[...], xf, preferred_element_type=jnp.float32)

    if hw % tile_hw != 0:
        # Mask padded lanes of the last (partial) spatial tile out of the stats.
        lane = jax.lax.broadcasted_iota(jnp.int32, y.shape, 1)
        valid = (t * tile_hw + lane) < hw
        y = jnp.where(valid, y, 0.0)

    s1_ref[...] += y
    s2_ref[...] += y * y

    @pl.when(t == pl.num_programs(1) - 1)
    def _finalize():
        sums_ref[:, 0:1] = jnp.sum(s1_ref[...], axis=1, keepdims=True)
        sums_ref[:, 1:2] = jnp.sum(s2_ref[...], axis=1, keepdims=True)


# ---------------------------------------------------------------------------
# Phase 2: y = W_scaled @ x (BN scale folded into the weight), + shift, ReLU,
# residual add. Fully parallel over (N, HW).
# ---------------------------------------------------------------------------
def _apply_kernel(x_ref, ws_ref, shift_ref, o_ref):
    x = x_ref[...]
    xf = x.astype(jnp.float32)
    y = jnp.dot(ws_ref[...], xf, preferred_element_type=jnp.float32)
    o_ref[...] = (jnp.maximum(y + shift_ref[...], 0.0) + xf).astype(o_ref.dtype)


# ---------------------------------------------------------------------------
# Wrapper.
# ---------------------------------------------------------------------------
def bottleneck_conv1i(x_nchw, w_oi, gamma, beta, *, eps=EPS, tile_hw=None,
                      use_fused=None):
    """Forward pass of BottleNeck_Layer_conv1i.

    x_nchw: (N, C, H, W), w_oi: (Cout, Cin) = Conv2d weight[:, :, 0, 0],
    gamma/beta: (Cout,) BN affine params. Conv bias cancels under training-mode BN.
    """
    N, C, H, W = x_nchw.shape
    Cout, Cin = w_oi.shape
    assert C == Cin == Cout, "residual add requires in_dim == out_dim"
    HW = H * W

    vmem_limit, target_block = _vmem_budgets()

    x3 = x_nchw.reshape(N, C, HW)          # free reshape on contiguous NCHW
    w_oi = w_oi.astype(jnp.float32)
    gamma = gamma.astype(jnp.float32)
    beta = beta.astype(jnp.float32)
    count = float(N * HW)

    # ---- small-activation fast path: single fused kernel --------------------
    act_f32_bytes = N * C * HW * 4
    w_bytes = C * C * 4
    fused_fits = (4 * act_f32_bytes + 2 * w_bytes + (2 << 20)) <= vmem_limit
    if use_fused is None:
        use_fused = fused_fits
    if use_fused:
        out3 = pl.pallas_call(
            functools.partial(_fused_kernel, eps=eps, count=count),
            out_shape=jax.ShapeDtypeStruct((N, C, HW), x_nchw.dtype),
            compiler_params=pltpu.CompilerParams(vmem_limit_bytes=vmem_limit),
        )(x3, w_oi, gamma.reshape(C, 1), beta.reshape(C, 1))
        return out3.reshape(N, C, H, W)

    # ---- two-phase streaming path -------------------------------------------
    thw = tile_hw if tile_hw is not None else _choose_tile_hw(HW, C, target_block)
    T = pl.cdiv(HW, thw)

    # Phase 1: per-image (race-free under parallel N) sum / sumsq slabs.
    sums = pl.pallas_call(
        functools.partial(_stats_kernel, hw=HW, tile_hw=thw),
        out_shape=jax.ShapeDtypeStruct((N, C, 2), jnp.float32),
        grid=(N, T),
        in_specs=[
            pl.BlockSpec((None, C, thw), lambda n, t: (n, 0, t)),
            pl.BlockSpec((C, C), lambda n, t: (0, 0)),
        ],
        out_specs=pl.BlockSpec((None, C, 2), lambda n, t: (n, 0, 0)),
        scratch_shapes=[
            pltpu.VMEM((C, thw), jnp.float32),
            pltpu.VMEM((C, thw), jnp.float32),
        ],
        compiler_params=pltpu.CompilerParams(
            dimension_semantics=("parallel", "arbitrary"),
            vmem_limit_bytes=vmem_limit),
    )(x3, w_oi)

    # Tiny per-channel finalize (plain JAX): merge per-image partials and fold
    # the BN scale into the conv weight.
    tot = jnp.sum(sums, axis=0)                         # (C, 2)
    mean = tot[:, 0] / count
    var = tot[:, 1] / count - mean * mean               # biased variance
    scale = gamma * jax.lax.rsqrt(var + eps)            # (C,)
    shift = (beta - mean * scale).reshape(C, 1)         # (C, 1)
    w_scaled = scale[:, None] * w_oi                    # (C, C)

    # Phase 2: normalize + ReLU + residual, fully parallel over (N, HW).
    out3 = pl.pallas_call(
        _apply_kernel,
        out_shape=jax.ShapeDtypeStruct((N, C, HW), x_nchw.dtype),
        grid=(N, T),
        in_specs=[
            pl.BlockSpec((None, C, thw), lambda n, t: (n, 0, t)),
            pl.BlockSpec((C, C), lambda n, t: (0, 0)),
            pl.BlockSpec((C, 1), lambda n, t: (0, 0)),
        ],
        out_specs=pl.BlockSpec((None, C, thw), lambda n, t: (n, 0, t)),
        compiler_params=pltpu.CompilerParams(
            dimension_semantics=("parallel", "parallel"),
            vmem_limit_bytes=vmem_limit),
    )(x3, w_scaled, shift)

    return out3.reshape(N, C, H, W)


# ---------------------------------------------------------------------------
# Pure-JAX reference matching the PyTorch forward (training-mode BatchNorm).
# ---------------------------------------------------------------------------
def reference(x, w_oi, b, gamma, beta, eps=EPS):
    y = jnp.einsum('oc,nchw->nohw', w_oi, x) + b[None, :, None, None]
    mean = jnp.mean(y, axis=(0, 2, 3), keepdims=True)
    var = jnp.mean((y - mean) ** 2, axis=(0, 2, 3), keepdims=True)
    out = (y - mean) * jax.lax.rsqrt(var + eps) * gamma[None, :, None, None] \
        + beta[None, :, None, None]
    return jnp.maximum(out, 0.0) + x


def _make_params(key, in_dim, out_dim):
    # Conv2d weight (out, in, 1, 1), xavier_uniform gain=1; bias=0; BN gamma=1, beta=0.
    bound = (6.0 / (in_dim + out_dim)) ** 0.5
    w_conv = jax.random.uniform(key, (out_dim, in_dim, 1, 1),
                                minval=-bound, maxval=bound, dtype=jnp.float32)
    w_oi = w_conv[:, :, 0, 0]                      # (Cout, Cin)
    b = jnp.zeros((out_dim,), jnp.float32)
    gamma = jnp.ones((out_dim,), jnp.float32)
    beta = jnp.zeros((out_dim,), jnp.float32)
    return w_oi, b, gamma, beta


if __name__ == "__main__":
    key = jax.random.PRNGKey(0)
    kx1, kx2, kw = jax.random.split(key, 3)

    in_dim = out_dim = 8
    w_oi, b, gamma, beta = _make_params(kw, in_dim, out_dim)

    # Test 1: small canonical shape -> fused single-pass VMEM-resident path.
    N, C, H, W = 2, in_dim, 16, 16
    x1 = jax.random.normal(kx1, (N, C, H, W), dtype=jnp.float32)
    out1 = bottleneck_conv1i(x1, w_oi, gamma, beta)
    jax.block_until_ready(out1)
    ref1 = reference(x1, w_oi, b, gamma, beta)
    assert out1.shape == (N, C, H, W)
    assert jnp.allclose(out1, ref1, atol=5e-4, rtol=5e-4), \
        f"test1 max err {jnp.max(jnp.abs(out1 - ref1))}"

    # Test 2: forced two-phase path, 128-lane tiles with HW=400 (exercises the
    # masked partial tile, per-image stats slabs under parallel N, deferred
    # reduction, and the scale-folded apply kernel).
    N2, H2, W2 = 2, 20, 20
    x2 = jax.random.normal(kx2, (N2, C, H2, W2), dtype=jnp.float32)
    out2 = bottleneck_conv1i(x2, w_oi, gamma, beta, tile_hw=128, use_fused=False)
    jax.block_until_ready(out2)
    ref2 = reference(x2, w_oi, b, gamma, beta)
    assert out2.shape == (N2, C, H2, W2)
    assert jnp.allclose(out2, ref2, atol=5e-4, rtol=5e-4), \
        f"test2 max err {jnp.max(jnp.abs(out2 - ref2))}"

    # Test 3: two-phase path with a single full-extent spatial tile per image
    # (init / accumulate / finalize all hit the same grid step).
    out3 = bottleneck_conv1i(x1, w_oi, gamma, beta, use_fused=False)
    jax.block_until_ready(out3)
    assert jnp.allclose(out3, ref1, atol=5e-4, rtol=5e-4), \
        f"test3 max err {jnp.max(jnp.abs(out3 - ref1))}"

    print("KERNEL_OK")
</pallas_src>

<mosaic_0001>
module attributes {stable_mosaic.version = 11 : i64} {
  func.func @_fused_kernel(%arg0: memref<2x8x256xf32, #tpu.memory_space<vmem>>, %arg1: memref<8x8xf32, #tpu.memory_space<vmem>>, %arg2: memref<8x1xf32, #tpu.memory_space<vmem>>, %arg3: memref<8x1xf32, #tpu.memory_space<vmem>>, %arg4: memref<2x8x256xf32, #tpu.memory_space<vmem>>) attributes {dimension_semantics = [], scalar_prefetch = 0 : i64, scratch_operands = 0 : i64, tpu.core_type = #tpu.core_type<tc>} {
    %c0 = arith.constant 0 : index
    %c0_0 = arith.constant 0 : index
    %c0_1 = arith.constant 0 : index
    %0 = vector.load %arg0[%c0, %c0_0, %c0_1] : memref<2x8x256xf32, #tpu.memory_space<vmem>>, vector<2x8x256xf32>
    %c0_2 = arith.constant 0 : index
    %c0_3 = arith.constant 0 : index
    %1 = vector.load %arg1[%c0_2, %c0_3] : memref<8x8xf32, #tpu.memory_space<vmem>>, vector<8x8xf32>
    "tpu.trace_start"() <{level = 10 : i32, message = "oc,nch->noh"}> : () -> ()
    %cst = arith.constant dense<0.000000e+00> : vector<2x256x8xf32>
    %2 = tpu.matmul %0, %1, %cst {dimension_numbers = #tpu.dot_dimension_numbers<[1], [1], [0, 2], [0], [0, 0, 0, 2, 1, 0], [], []>} : vector<2x8x256xf32>, vector<8x8xf32>, vector<2x256x8xf32> -> vector<2x256x8xf32>
    %3 = tpu.transpose %2, [0, 2, 1] : vector<2x256x8xf32> -> vector<2x8x256xf32>
    "tpu.trace_stop"() : () -> ()
    %cst_4 = arith.constant dense<0.000000e+00> : vector<8x256xf32>
    %4 = vector.multi_reduction <add>, %3, %cst_4 [0] : vector<2x8x256xf32> to vector<8x256xf32>
    %5 = arith.mulf %3, %3 : vector<2x8x256xf32>
    %cst_5 = arith.constant dense<0.000000e+00> : vector<8x256xf32>
    %6 = vector.multi_reduction <add>, %5, %cst_5 [0] : vector<2x8x256xf32> to vector<8x256xf32>
    %cst_6 = arith.constant dense<0.000000e+00> : vector<8xf32>
    %7 = vector.multi_reduction <add>, %4, %cst_6 [1] : vector<8x256xf32> to vector<8xf32>
    %8 = vector.shape_cast %7 : vector<8xf32> to vector<8x1xf32>
    %cst_7 = arith.constant dense<0.000000e+00> : vector<8xf32>
    %9 = vector.multi_reduction <add>, %6, %cst_7 [1] : vector<8x256xf32> to vector<8xf32>
    %10 = vector.shape_cast %9 : vector<8xf32> to vector<8x1xf32>
    %cst_8 = arith.constant 5.120000e+02 : f32
    %11 = vector.broadcast %cst_8 : f32 to vector<8x1xf32>
    %12 = arith.divf %8, %11 : vector<8x1xf32>
    %cst_9 = arith.constant 5.120000e+02 : f32
    %13 = vector.broadcast %cst_9 : f32 to vector<8x1xf32>
    %14 = arith.divf %10, %13 : vector<8x1xf32>
    %15 = arith.mulf %12, %12 : vector<8x1xf32>
    %16 = arith.subf %14, %15 : vector<8x1xf32>
    %c0_10 = arith.constant 0 : index
    %c0_11 = arith.constant 0 : index
    %17 = vector.load %arg2[%c0_10, %c0_11] : memref<8x1xf32, #tpu.memory_space<vmem>>, vector<8x1xf32>
    %cst_12 = arith.constant 9.99999974E-6 : f32
    %18 = vector.broadcast %cst_12 : f32 to vector<8x1xf32>
    %19 = arith.addf %16, %18 : vector<8x1xf32>
    %20 = math.rsqrt %19 : vector<8x1xf32>
    %21 = arith.mulf %17, %20 : vector<8x1xf32>
    %c0_13 = arith.constant 0 : index
    %c0_14 = arith.constant 0 : index
    %22 = vector.load %arg3[%c0_13, %c0_14] : memref<8x1xf32, #tpu.memory_space<vmem>>, vector<8x1xf32>
    %23 = arith.mulf %12, %21 : vector<8x1xf32>
    %24 = arith.subf %22, %23 : vector<8x1xf32>
    %25 = vector.shape_cast %21 : vector<8x1xf32> to vector<1x8x1xf32>
    %26 = vector.broadcast %25 : vector<1x8x1xf32> to vector<2x8x256xf32>
    %27 = arith.mulf %3, %26 : vector<2x8x256xf32>
    %28 = vector.shape_cast %24 : vector<8x1xf32> to vector<1x8x1xf32>
    %29 = vector.broadcast %28 : vector<1x8x1xf32> to vector<2x8x256xf32>
    %30 = arith.addf %27, %29 : vector<2x8x256xf32>
    %cst_15 = arith.constant 0.000000e+00 : f32
    %31 = vector.broadcast %cst_15 : f32 to vector<2x8x256xf32>
    %32 = arith.maximumf %30, %31 : vector<2x8x256xf32>
    %33 = arith.addf %32, %0 : vector<2x8x256xf32>
    %c0_16 = arith.constant 0 : index
    %c0_17 = arith.constant 0 : index
    %c0_18 = arith.constant 0 : index
    %34 = vector.load %arg4[%c0_16, %c0_17, %c0_18] : memref<2x8x256xf32, #tpu.memory_space<vmem>>, vector<2x8x256xf32>
    tpu.vector_store %arg4[%c0_16, %c0_17, %c0_18], %33 {strides = array<i32>} : memref<2x8x256xf32, #tpu.memory_space<vmem>>, vector<2x8x256xf32>,
    return
  }
}

</mosaic_0001>

<llo_original>
// kernel: tpu_custom_call.1
$region0: #{tpu_custom_call.1}
  #allocation0 [shape = 'u32[]', space=smem, size = 0x4, offset = 0x4, fixed_abs, tag = 'smem constant byte address 0x4 - core index']
  #allocation1 [shape = 'u32[144,128]{1,0:T(1,128)}', space=vmem, size = 0x12000, scoped, tag = 'internal scratch']
  %s0 = inlined_call_operand.hbm [shape: f32[2,8,256], index: 0, kind: input, shape index: {}]
  %s1 = inlined_call_operand.vmem [shape: f32[8,8], index: 1, kind: input, shape index: {}]
  %s2 = inlined_call_operand.vmem [shape: f32[8,1], index: 2, kind: input, shape index: {}]
  %s3 = inlined_call_operand.vmem [shape: f32[8,1], index: 3, kind: input, shape index: {}]
  %s4 = inlined_call_operand.hbm [shape: f32[2,8,256], index: 4, kind: output, shape index: {}]
  %s5 = sld [smem:[#allocation0]]
  $region30: #{tpu_custom_call.1} parent=0
    _
  %s7 = ssub.s32 1, %s5
  %s8 = scalar_select 0, %s7, %s5
  $region1: #{tpu_custom_call.1} parent=0
    #allocation2 [shape = 'u8[16384]{0}', space=vmem, size = 0x4000, scoped, tag = 'input window, operand 0, single buffered']
    #allocation3 [shape = 's32[1]{0}', space=sflag, size = 0x4, scoped, tag = 'scoped memory for tpu_custom_call.1']
    #allocation4 [shape = 's32[1]{0}', space=sflag, size = 0x4, scoped, tag = 'scoped memory for tpu_custom_call.1']
    #allocation5 [shape = 'u8[16384]{0}', space=vmem, size = 0x4000, scoped, tag = 'output window, operand 0, single buffered']
    %9 = vsyncpa [#allocation3], 0
    %10 = vsyncpa [#allocation4], 0
    // Predicated region
    $region2: #{tpu_custom_call.1} parent=1 // pred_check
      _
    $region3: #{tpu_custom_call.1} parent=1 // pred_check_branch
      %12 = sbr.rel (0) target = $region5
    $region4: #{tpu_custom_call.1} parent=1 // pred_region
      %s14 = ssub.s32 512, 512
      %15 = vsyncadd [#allocation3], %s14
      %s16 = sshll.u32 [#allocation2], 4
      %s17 = int_to_ptr.vmem [resolvable:$true] %s16
      %22 = dma.hbm_to_vmem [thread:$0]  %s0, 512, %s17, [#allocation3], 256, 256, 16
    $region5: #{tpu_custom_call.1} parent=1 // pred_fallthru
      _
    // Predicated region
    $region6: #{tpu_custom_call.1} parent=1 // pred_check
      _
    $region7: #{tpu_custom_call.1} parent=1 // pred_check_branch
      %24 = sbr.rel (0) target = $region9
    $region8: #{tpu_custom_call.1} parent=1 // pred_region
      _
    $region9: #{tpu_custom_call.1} parent=1 // pred_fallthru
      _
    // Predicated region
    $region10: #{tpu_custom_call.1} parent=1 // pred_check
      _
    $region11: #{tpu_custom_call.1} parent=1 // pred_check_branch
      %26 = sbr.rel (0) target = $region13
    $region12: #{tpu_custom_call.1} parent=1 // pred_region
      _
    $region13: #{tpu_custom_call.1} parent=1 // pred_fallthru
      _
    // Predicated region
    $region14: #{tpu_custom_call.1} parent=1 // pred_check
      _
    $region15: #{tpu_custom_call.1} parent=1 // pred_check_branch
      %28 = sbr.rel (0) target = $region17
    $region16: #{tpu_custom_call.1} parent=1 // pred_region
      _
    $region17: #{tpu_custom_call.1} parent=1 // pred_fallthru
      _
    // Predicated region
    $region18: #{tpu_custom_call.1} parent=1 // pred_check
      _
    $region19: #{tpu_custom_call.1} parent=1 // pred_check_branch
      %30 = sbr.rel (0) target = $region21
    $region20: #{tpu_custom_call.1} parent=1 // pred_region
      %31 = dma.done [#allocation3], 512
    $region21: #{tpu_custom_call.1} parent=1 // pred_fallthru
      _
    %v32 = vld [vmem:[#allocation2] sm:$0xff]
    %v33 = vld [vmem:[#allocation2 + $0x8] sm:$0xff]
    %v34 = vld [vmem:[#allocation2 + $0x10] sm:$0xff]
    %v35 = vld [vmem:[#allocation2 + $0x18] sm:$0xff]
    %v36 = vld [vmem:[%s1] sm:$0xff]
    %37 = vxpose.xlu0.b32.start [1/16] %v32, 128
    %38 = vxpose.xlu0.b32.cont [2/16] 0.0, 128
    %39 = vxpose.xlu0.b32.cont [3/16] 0.0, 128
    %40 = vxpose.xlu0.b32.cont [4/16] 0.0, 128
    %41 = vxpose.xlu0.b32.cont [5/16] 0.0, 128
    %42 = vxpose.xlu0.b32.cont [6/16] 0.0, 128
    %43 = vxpose.xlu0.b32.cont [7/16] 0.0, 128
    %44 = vxpose.xlu0.b32.cont [8/16] 0.0, 128
    %45 = vxpose.xlu0.b32.cont [9/16] 0.0, 128
    %46 = vxpose.xlu0.b32.cont [10/16] 0.0, 128
    %47 = vxpose.xlu0.b32.cont [11/16] 0.0, 128
    %48 = vxpose.xlu0.b32.cont [12/16] 0.0, 128
    %49 = vxpose.xlu0.b32.cont [13/16] 0.0, 128
    %50 = vxpose.xlu0.b32.cont [14/16] 0.0, 128
    %51 = vxpose.xlu0.b32.cont [15/16] 0.0, 128
    %52 = vxpose.xlu0.b32.end [16/16] 0.0, 128
    %v53 = vpop.trf.xlu0
    %v54 = vpop.trf.xlu0
    %v55 = vpop.trf.xlu0
    %v56 = vpop.trf.xlu0
    %v57 = vpop.trf.xlu0
    %v58 = vpop.trf.xlu0
    %v59 = vpop.trf.xlu0
    %v60 = vpop.trf.xlu0
    %v61 = vpop.trf.xlu0
    %v62 = vpop.trf.xlu0
    %v63 = vpop.trf.xlu0
    %v64 = vpop.trf.xlu0
    %v65 = vpop.trf.xlu0
    %v66 = vpop.trf.xlu0
    %v67 = vpop.trf.xlu0
    %v68 = vpop.trf.xlu0
    %69 = vxpose.xlu0.b32.start [1/16] %v33, 128
    %70 = vxpose.xlu0.b32.cont [2/16] 0.0, 128
    %71 = vxpose.xlu0.b32.cont [3/16] 0.0, 128
    %72 = vxpose.xlu0.b32.cont [4/16] 0.0, 128
    %73 = vxpose.xlu0.b32.cont [5/16] 0.0, 128
    %74 = vxpose.xlu0.b32.cont [6/16] 0.0, 128
    %75 = vxpose.xlu0.b32.cont [7/16] 0.0, 128
    %76 = vxpose.xlu0.b32.cont [8/16] 0.0, 128
    %77 = vxpose.xlu0.b32.cont [9/16] 0.0, 128
    %78 = vxpose.xlu0.b32.cont [10/16] 0.0, 128
    %79 = vxpose.xlu0.b32.cont [11/16] 0.0, 128
    %80 = vxpose.xlu0.b32.cont [12/16] 0.0, 128
    %81 = vxpose.xlu0.b32.cont [13/16] 0.0, 128
    %82 = vxpose.xlu0.b32.cont [14/16] 0.0, 128
    %83 = vxpose.xlu0.b32.cont [15/16] 0.0, 128
    %84 = vxpose.xlu0.b32.end [16/16] 0.0, 128
    %v85 = vpop.trf.xlu0
    %v86 = vpop.trf.xlu0
    %v87 = vpop.trf.xlu0
    %v88 = vpop.trf.xlu0
    %v89 = vpop.trf.xlu0
    %v90 = vpop.trf.xlu0
    %v91 = vpop.trf.xlu0
    %v92 = vpop.trf.xlu0
    %v93 = vpop.trf.xlu0
    %v94 = vpop.trf.xlu0
    %v95 = vpop.trf.xlu0
    %v96 = vpop.trf.xlu0
    %v97 = vpop.trf.xlu0
    %v98 = vpop.trf.xlu0
    %v99 = vpop.trf.xlu0
    %v100 = vpop.trf.xlu0
    %101 = vxpose.xlu0.b32.start [1/16] %v34, 128
    %102 = vxpose.xlu0.b32.cont [2/16] 0.0, 128
    %103 = vxpose.xlu0.b32.cont [3/16] 0.0, 128
    %104 = vxpose.xlu0.b32.cont [4/16] 0.0, 128
    %105 = vxpose.xlu0.b32.cont [5/16] 0.0, 128
    %106 = vxpose.xlu0.b32.cont [6/16] 0.0, 128
    %107 = vxpose.xlu0.b32.cont [7/16] 0.0, 128
    %108 = vxpose.xlu0.b32.cont [8/16] 0.0, 128
    %109 = vxpose.xlu0.b32.cont [9/16] 0.0, 128
    %110 = vxpose.xlu0.b32.cont [10/16] 0.0, 128
    %111 = vxpose.xlu0.b32.cont [11/16] 0.0, 128
    %112 = vxpose.xlu0.b32.cont [12/16] 0.0, 128
    %113 = vxpose.xlu0.b32.cont [13/16] 0.0, 128
    %114 = vxpose.xlu0.b32.cont [14/16] 0.0, 128
    %115 = vxpose.xlu0.b32.cont [15/16] 0.0, 128
    %116 = vxpose.xlu0.b32.end [16/16] 0.0, 128
    %v117 = vpop.trf.xlu0
    %v118 = vpop.trf.xlu0
    %v119 = vpop.trf.xlu0
    %v120 = vpop.trf.xlu0
    %v121 = vpop.trf.xlu0
    %v122 = vpop.trf.xlu0
    %v123 = vpop.trf.xlu0
    %v124 = vpop.trf.xlu0
    %v125 = vpop.trf.xlu0
    %v126 = vpop.trf.xlu0
    %v127 = vpop.trf.xlu0
    %v128 = vpop.trf.xlu0
    %v129 = vpop.trf.xlu0
    %v130 = vpop.trf.xlu0
    %v131 = vpop.trf.xlu0
    %v132 = vpop.trf.xlu0
    %133 = vxpose.xlu0.b32.start [1/16] %v35, 128
    %134 = vxpose.xlu0.b32.cont [2/16] 0.0, 128
    %135 = vxpose.xlu0.b32.cont [3/16] 0.0, 128
    %136 = vxpose.xlu0.b32.cont [4/16] 0.0, 128
    %137 = vxpose.xlu0.b32.cont [5/16] 0.0, 128
    %138 = vxpose.xlu0.b32.cont [6/16] 0.0, 128
    %139 = vxpose.xlu0.b32.cont [7/16] 0.0, 128
    %140 = vxpose.xlu0.b32.cont [8/16] 0.0, 128
    %141 = vxpose.xlu0.b32.cont [9/16] 0.0, 128
    %142 = vxpose.xlu0.b32.cont [10/16] 0.0, 128
    %143 = vxpose.xlu0.b32.cont [11/16] 0.0, 128
    %144 = vxpose.xlu0.b32.cont [12/16] 0.0, 128
    %145 = vxpose.xlu0.b32.cont [13/16] 0.0, 128
    %146 = vxpose.xlu0.b32.cont [14/16] 0.0, 128
    %147 = vxpose.xlu0.b32.cont [15/16] 0.0, 128
    %148 = vxpose.xlu0.b32.end [16/16] 0.0, 128
    %v149 = vpop.trf.xlu0
    %v150 = vpop.trf.xlu0
    %v151 = vpop.trf.xlu0
    %v152 = vpop.trf.xlu0
    %v153 = vpop.trf.xlu0
    %v154 = vpop.trf.xlu0
    %v155 = vpop.trf.xlu0
    %v156 = vpop.trf.xlu0
    %v157 = vpop.trf.xlu0
    %v158 = vpop.trf.xlu0
    %v159 = vpop.trf.xlu0
    %v160 = vpop.trf.xlu0
    %v161 = vpop.trf.xlu0
    %v162 = vpop.trf.xlu0
    %v163 = vpop.trf.xlu0
    %v164 = vpop.trf.xlu0
    %vm165 = vcmask 64512
    %v167 = vsel %vm165, %v53, 0
    %v170 = vsel %vm165, %v54, 0
    %v173 = vsel %vm165, %v55, 0
    %v176 = vsel %vm165, %v56, 0
    %v179 = vsel %vm165, %v57, 0
    %v182 = vsel %vm165, %v58, 0
    %v185 = vsel %vm165, %v59, 0
    %v188 = vsel %vm165, %v60, 0
    %v191 = vsel %vm165, %v61, 0
    %v194 = vsel %vm165, %v62, 0
    %v197 = vsel %vm165, %v63, 0
    %v200 = vsel %vm165, %v64, 0
    %v203 = vsel %vm165, %v65, 0
    %v206 = vsel %vm165, %v66, 0
    %v209 = vsel %vm165, %v67, 0
    %v212 = vsel %vm165, %v68, 0
    %v215 = vsel %vm165, %v85, 0
    %v218 = vsel %vm165, %v86, 0
    %v221 = vsel %vm165, %v87, 0
    %v224 = vsel %vm165, %v88, 0
    %v227 = vsel %vm165, %v89, 0
    %v230 = vsel %vm165, %v90, 0
    %v233 = vsel %vm165, %v91, 0
    %v236 = vsel %vm165, %v92, 0
    %v239 = vsel %vm165, %v93, 0
    %v242 = vsel %vm165, %v94, 0
    %v245 = vsel %vm165, %v95, 0
    %v248 = vsel %vm165, %v96, 0
    %v251 = vsel %vm165, %v97, 0
    %v254 = vsel %vm165, %v98, 0
    %v257 = vsel %vm165, %v99, 0
    %v260 = vsel %vm165, %v100, 0
    %v263 = vsel %vm165, %v117, 0
    %v266 = vsel %vm165, %v118, 0
    %v269 = vsel %vm165, %v119, 0
    %v272 = vsel %vm165, %v120, 0
    %v275 = vsel %vm165, %v121, 0
    %v278 = vsel %vm165, %v122, 0
    %v281 = vsel %vm165, %v123, 0
    %v284 = vsel %vm165, %v124, 0
    %v287 = vsel %vm165, %v125, 0
    %v290 = vsel %vm165, %v126, 0
    %v293 = vsel %vm165, %v127, 0
    %v296 = vsel %vm165, %v128, 0
    %v299 = vsel %vm165, %v129, 0
    %v302 = vsel %vm165, %v130, 0
    %v305 = vsel %vm165, %v131, 0
    %v308 = vsel %vm165, %v132, 0
    %v311 = vsel %vm165, %v149, 0
    %v314 = vsel %vm165, %v150, 0
    %v317 = vsel %vm165, %v151, 0
    %v320 = vsel %vm165, %v152, 0
    %v323 = vsel %vm165, %v153, 0
    %v326 = vsel %vm165, %v154, 0
    %v329 = vsel %vm165, %v155, 0
    %v332 = vsel %vm165, %v156, 0
    %v335 = vsel %vm165, %v157, 0
    %v338 = vsel %vm165, %v158, 0
    %v341 = vsel %vm165, %v159, 0
    %v344 = vsel %vm165, %v160, 0
    %v347 = vsel %vm165, %v161, 0
    %v350 = vsel %vm165, %v162, 0
    %v353 = vsel %vm165, %v163, 0
    %v356 = vsel %vm165, %v164, 0
    %v359 = vsel %vm165, %v36, 0
    %361 = vmatprep.subr.mxu0 0.0
    %362 = vmatpush1.xpose.msra.mxu0 0.0
    %363 = vmatprep.subr.mxu0 0.0
    %364 = vmatpush1.xpose.msra.mxu0 0.0
    %365 = vmatprep.subr.mxu0 0.0
    %366 = vmatpush1.xpose.msra.mxu0 0.0
    %367 = vmatprep.subr.mxu0 0.0
    %368 = vmatpush1.xpose.msra.mxu0 0.0
    %369 = vmatprep.subr.mxu0 0.0
    %370 = vmatpush1.xpose.msra.mxu0 0.0
    %371 = vmatprep.subr.mxu0 0.0
    %372 = vmatpush1.xpose.msra.mxu0 0.0
    %373 = vmatprep.subr.mxu0 0.0
    %374 = vmatpush1.xpose.msra.mxu0 0.0
    %375 = vmatprep.subr.mxu0 0.0
    %376 = vmatpush1.xpose.msra.mxu0 0.0
    %377 = vmatprep.subr.mxu0 0.0
    %378 = vmatpush1.xpose.msra.mxu0 0.0
    %379 = vmatprep.subr.mxu0 0.0
    %380 = vmatpush1.xpose.msra.mxu0 0.0
    %381 = vmatprep.subr.mxu0 0.0
    %382 = vmatpush1.xpose.msra.mxu0 0.0
    %383 = vmatprep.subr.mxu0 0.0
    %384 = vmatpush1.xpose.msra.mxu0 0.0
    %385 = vmatprep.subr.mxu0 0.0
    %386 = vmatpush1.xpose.msra.mxu0 0.0
    %387 = vmatprep.subr.mxu0 0.0
    %388 = vmatpush1.xpose.msra.mxu0 0.0
    %389 = vmatprep.subr.mxu0 0.0
    %390 = vmatpush1.xpose.msra.mxu0 0.0
    %391 = vmatprep.subr.mxu0 0.0
    %392 = vmatpush1.xpose.msra.mxu0 %v359
    %393 = vmatprep.subr.mxu0 0.0
    %394 = vmatpush2.xpose.msra.mxu0 0.0
    %395 = vmatprep.subr.mxu0 0.0
    %396 = vmatpush2.xpose.msra.mxu0 0.0
    %397 = vmatprep.subr.mxu0 0.0
    %398 = vmatpush2.xpose.msra.mxu0 0.0
    %399 = vmatprep.subr.mxu0 0.0
    %400 = vmatpush2.xpose.msra.mxu0 0.0
    %401 = vmatprep.subr.mxu0 0.0
    %402 = vmatpush2.xpose.msra.mxu0 0.0
    %403 = vmatprep.subr.mxu0 0.0
    %404 = vmatpush2.xpose.msra.mxu0 0.0
    %405 = vmatprep.subr.mxu0 0.0
    %406 = vmatpush2.xpose.msra.mxu0 0.0
    %407 = vmatprep.subr.mxu0 0.0
    %408 = vmatpush2.xpose.msra.mxu0 0.0
    %409 = vmatprep.subr.mxu0 0.0
    %410 = vmatpush2.xpose.msra.mxu0 0.0
    %411 = vmatprep.subr.mxu0 0.0
    %412 = vmatpush2.xpose.msra.mxu0 0.0
    %413 = vmatprep.subr.mxu0 0.0
    %414 = vmatpush2.xpose.msra.mxu0 0.0
    %415 = vmatprep.subr.mxu0 0.0
    %416 = vmatpush2.xpose.msra.mxu0 0.0
    %417 = vmatprep.subr.mxu0 0.0
    %418 = vmatpush2.xpose.msra.mxu0 0.0
    %419 = vmatprep.subr.mxu0 0.0
    %420 = vmatpush2.xpose.msra.mxu0 0.0
    %421 = vmatprep.subr.mxu0 0.0
    %422 = vmatpush2.xpose.msra.mxu0 0.0
    %423 = vmatprep.subr.mxu0 0.0
    %424 = vmatpush2.xpose.msra.mxu0 0.0
    %425 = vmatprep.mubr.f32.mxu0 0.0
    %426 = vmatmul.mubr.f32.gmra.mxu0 %v167
    %v427 = vpop.f32.mrf.mxu0
    %v428 = vadd.f32 0.0, %v427
    %v429 = vpop.f32.mrf.mxu0
    %430 = vmatprep.mubr.f32.mxu0 0.0
    %431 = vmatmul.mubr.f32.gmra.mxu0 %v170
    %v432 = vpop.f32.mrf.mxu0
    %v433 = vadd.f32 0.0, %v432
    %v434 = vpop.f32.mrf.mxu0
    %435 = vmatprep.mubr.f32.mxu0 0.0
    %436 = vmatmul.mubr.f32.gmra.mxu0 %v173
    %v437 = vpop.f32.mrf.mxu0
    %v438 = vadd.f32 0.0, %v437
    %v439 = vpop.f32.mrf.mxu0
    %440 = vmatprep.mubr.f32.mxu0 0.0
    %441 = vmatmul.mubr.f32.gmra.mxu0 %v176
    %v442 = vpop.f32.mrf.mxu0
    %v443 = vadd.f32 0.0, %v442
    %v444 = vpop.f32.mrf.mxu0
    %445 = vmatprep.mubr.f32.mxu0 0.0
    %446 = vmatmul.mubr.f32.gmra.mxu0 %v179
    %v447 = vpop.f32.mrf.mxu0
    %v448 = vadd.f32 0.0, %v447
    %v449 = vpop.f32.mrf.mxu0
    %450 = vmatprep.mubr.f32.mxu0 0.0
    %451 = vmatmul.mubr.f32.gmra.mxu0 %v182
    %v452 = vpop.f32.mrf.mxu0
    %v453 = vadd.f32 0.0, %v452
    %v454 = vpop.f32.mrf.mxu0
    %455 = vmatprep.mubr.f32.mxu0 0.0
    %456 = vmatmul.mubr.f32.gmra.mxu0 %v185
    %v457 = vpop.f32.mrf.mxu0
    %v458 = vadd.f32 0.0, %v457
    %v459 = vpop.f32.mrf.mxu0
    %460 = vmatprep.mubr.f32.mxu0 0.0
    %461 = vmatmul.mubr.f32.gmra.mxu0 %v188
    %v462 = vpop.f32.mrf.mxu0
    %v463 = vadd.f32 0.0, %v462
    %v464 = vpop.f32.mrf.mxu0
    %465 = vmatprep.mubr.f32.mxu0 0.0
    %466 = vmatmul.mubr.f32.gmra.mxu0 %v191
    %v467 = vpop.f32.mrf.mxu0
    %v468 = vadd.f32 0.0, %v467
    %v469 = vpop.f32.mrf.mxu0
    %470 = vmatprep.mubr.f32.mxu0 0.0
    %471 = vmatmul.mubr.f32.gmra.mxu0 %v194
    %v472 = vpop.f32.mrf.mxu0
    %v473 = vadd.f32 0.0, %v472
    %v474 = vpop.f32.mrf.mxu0
    %475 = vmatprep.mubr.f32.mxu0 0.0
    %476 = vmatmul.mubr.f32.gmra.mxu0 %v197
    %v477 = vpop.f32.mrf.mxu0
    %v478 = vadd.f32 0.0, %v477
    %v479 = vpop.f32.mrf.mxu0
    %480 = vmatprep.mubr.f32.mxu0 0.0
    %481 = vmatmul.mubr.f32.gmra.mxu0 %v200
    %v482 = vpop.f32.mrf.mxu0
    %v483 = vadd.f32 0.0, %v482
    %v484 = vpop.f32.mrf.mxu0
    %485 = vmatprep.mubr.f32.mxu0 0.0
    %486 = vmatmul.mubr.f32.gmra.mxu0 %v203
    %v487 = vpop.f32.mrf.mxu0
    %v488 = vadd.f32 0.0, %v487
    %v489 = vpop.f32.mrf.mxu0
    %490 = vmatprep.mubr.f32.mxu0 0.0
    %491 = vmatmul.mubr.f32.gmra.mxu0 %v206
    %v492 = vpop.f32.mrf.mxu0
    %v493 = vadd.f32 0.0, %v492
    %v494 = vpop.f32.mrf.mxu0
    %495 = vmatprep.mubr.f32.mxu0 0.0
    %496 = vmatmul.mubr.f32.gmra.mxu0 %v209
    %v497 = vpop.f32.mrf.mxu0
    %v498 = vadd.f32 0.0, %v497
    %v499 = vpop.f32.mrf.mxu0
    %500 = vmatprep.mubr.f32.mxu0 0.0
    %501 = vmatmul.mubr.f32.gmra.mxu0 %v212
    %v502 = vpop.f32.mrf.mxu0
    %v503 = vadd.f32 0.0, %v502
    %v504 = vpop.f32.mrf.mxu0
    %505 = vmatprep.mubr.f32.mxu0 0.0
    %506 = vmatmul.mubr.f32.gmra.mxu0 %v215
    %v507 = vpop.f32.mrf.mxu0
    %v508 = vadd.f32 0.0, %v507
    %v509 = vpop.f32.mrf.mxu0
    %510 = vmatprep.mubr.f32.mxu0 0.0
    %511 = vmatmul.mubr.f32.gmra.mxu0 %v218
    %v512 = vpop.f32.mrf.mxu0
    %v513 = vadd.f32 0.0, %v512
    %v514 = vpop.f32.mrf.mxu0
    %515 = vmatprep.mubr.f32.mxu0 0.0
    %516 = vmatmul.mubr.f32.gmra.mxu0 %v221
    %v517 = vpop.f32.mrf.mxu0
    %v518 = vadd.f32 0.0, %v517
    %v519 = vpop.f32.mrf.mxu0
    %520 = vmatprep.mubr.f32.mxu0 0.0
    %521 = vmatmul.mubr.f32.gmra.mxu0 %v224
    %v522 = vpop.f32.mrf.mxu0
    %v523 = vadd.f32 0.0, %v522
    %v524 = vpop.f32.mrf.mxu0
    %525 = vmatprep.mubr.f32.mxu0 0.0
    %526 = vmatmul.mubr.f32.gmra.mxu0 %v227
    %v527 = vpop.f32.mrf.mxu0
    %v528 = vadd.f32 0.0, %v527
    %v529 = vpop.f32.mrf.mxu0
    %530 = vmatprep.mubr.f32.mxu0 0.0
    %531 = vmatmul.mubr.f32.gmra.mxu0 %v230
    %v532 = vpop.f32.mrf.mxu0
    %v533 = vadd.f32 0.0, %v532
    %v534 = vpop.f32.mrf.mxu0
    %535 = vmatprep.mubr.f32.mxu0 0.0
    %536 = vmatmul.mubr.f32.gmra.mxu0 %v233
    %v537 = vpop.f32.mrf.mxu0
    %v538 = vadd.f32 0.0, %v537
    %v539 = vpop.f32.mrf.mxu0
    %540 = vmatprep.mubr.f32.mxu0 0.0
    %541 = vmatmul.mubr.f32.gmra.mxu0 %v236
    %v542 = vpop.f32.mrf.mxu0
    %v543 = vadd.f32 0.0, %v542
    %v544 = vpop.f32.mrf.mxu0
    %545 = vmatprep.mubr.f32.mxu0 0.0
    %546 = vmatmul.mubr.f32.gmra.mxu0 %v239
    %v547 = vpop.f32.mrf.mxu0
    %v548 = vadd.f32 0.0, %v547
    %v549 = vpop.f32.mrf.mxu0
    %550 = vmatprep.mubr.f32.mxu0 0.0
    %551 = vmatmul.mubr.f32.gmra.mxu0 %v242
    %v552 = vpop.f32.mrf.mxu0
    %v553 = vadd.f32 0.0, %v552
    %v554 = vpop.f32.mrf.mxu0
    %555 = vmatprep.mubr.f32.mxu0 0.0
    %556 = vmatmul.mubr.f32.gmra.mxu0 %v245
    %v557 = vpop.f32.mrf.mxu0
    %v558 = vadd.f32 0.0, %v557
    %v559 = vpop.f32.mrf.mxu0
    %560 = vmatprep.mubr.f32.mxu0 0.0
    %561 = vmatmul.mubr.f32.gmra.mxu0 %v248
    %v562 = vpop.f32.mrf.mxu0
    %v563 = vadd.f32 0.0, %v562
    %v564 = vpop.f32.mrf.mxu0
    %565 = vmatprep.mubr.f32.mxu0 0.0
    %566 = vmatmul.mubr.f32.gmra.mxu0 %v251
    %v567 = vpop.f32.mrf.mxu0
    %v568 = vadd.f32 0.0, %v567
    %v569 = vpop.f32.mrf.mxu0
    %570 = vmatprep.mubr.f32.mxu0 0.0
    %571 = vmatmul.mubr.f32.gmra.mxu0 %v254
    %v572 = vpop.f32.mrf.mxu0
    %v573 = vadd.f32 0.0, %v572
    %v574 = vpop.f32.mrf.mxu0
    %575 = vmatprep.mubr.f32.mxu0 0.0
    %576 = vmatmul.mubr.f32.gmra.mxu0 %v257
    %v577 = vpop.f32.mrf.mxu0
    %v578 = vadd.f32 0.0, %v577
    %v579 = vpop.f32.mrf.mxu0
    %580 = vmatprep.mubr.f32.mxu0 0.0
    %581 = vmatmul.mubr.f32.gmra.mxu0 %v260
    %v582 = vpop.f32.mrf.mxu0
    %v583 = vadd.f32 0.0, %v582
    %v584 = vpop.f32.mrf.mxu0
    %585 = vmatprep.mubr.f32.mxu0 0.0
    %586 = vmatmul.mubr.f32.gmra.mxu0 %v263
    %v587 = vpop.f32.mrf.mxu0
    %v588 = vadd.f32 0.0, %v587
    %v589 = vpop.f32.mrf.mxu0
    %590 = vmatprep.mubr.f32.mxu0 0.0
    %591 = vmatmul.mubr.f32.gmra.mxu0 %v266
    %v592 = vpop.f32.mrf.mxu0
    %v593 = vadd.f32 0.0, %v592
    %v594 = vpop.f32.mrf.mxu0
    %595 = vmatprep.mubr.f32.mxu0 0.0
    %596 = vmatmul.mubr.f32.gmra.mxu0 %v269
    %v597 = vpop.f32.mrf.mxu0
    %v598 = vadd.f32 0.0, %v597
    %v599 = vpop.f32.mrf.mxu0
    %600 = vmatprep.mubr.f32.mxu0 0.0
    %601 = vmatmul.mubr.f32.gmra.mxu0 %v272
    %v602 = vpop.f32.mrf.mxu0
    %v603 = vadd.f32 0.0, %v602
    %v604 = vpop.f32.mrf.mxu0
    %605 = vmatprep.mubr.f32.mxu0 0.0
    %606 = vmatmul.mubr.f32.gmra.mxu0 %v275
    %v607 = vpop.f32.mrf.mxu0
    %v608 = vadd.f32 0.0, %v607
    %v609 = vpop.f32.mrf.mxu0
    %610 = vmatprep.mubr.f32.mxu0 0.0
    %611 = vmatmul.mubr.f32.gmra.mxu0 %v278
    %v612 = vpop.f32.mrf.mxu0
    %v613 = vadd.f32 0.0, %v612
    %v614 = vpop.f32.mrf.mxu0
    %615 = vmatprep.mubr.f32.mxu0 0.0
    %616 = vmatmul.mubr.f32.gmra.mxu0 %v281
    %v617 = vpop.f32.mrf.mxu0
    %v618 = vadd.f32 0.0, %v617
    %v619 = vpop.f32.mrf.mxu0
    %620 = vmatprep.mubr.f32.mxu0 0.0
    %621 = vmatmul.mubr.f32.gmra.mxu0 %v284
    %v622 = vpop.f32.mrf.mxu0
    %v623 = vadd.f32 0.0, %v622
    %v624 = vpop.f32.mrf.mxu0
    %625 = vmatprep.mubr.f32.mxu0 0.0
    %626 = vmatmul.mubr.f32.gmra.mxu0 %v287
    %v627 = vpop.f32.mrf.mxu0
    %v628 = vadd.f32 0.0, %v627
    %v629 = vpop.f32.mrf.mxu0
    %630 = vmatprep.mubr.f32.mxu0 0.0
    %631 = vmatmul.mubr.f32.gmra.mxu0 %v290
    %v632 = vpop.f32.mrf.mxu0
    %v633 = vadd.f32 0.0, %v632
    %v634 = vpop.f32.mrf.mxu0
    %635 = vmatprep.mubr.f32.mxu0 0.0
    %636 = vmatmul.mubr.f32.gmra.mxu0 %v293
    %v637 = vpop.f32.mrf.mxu0
    %v638 = vadd.f32 0.0, %v637
    %v639 = vpop.f32.mrf.mxu0
    %640 = vmatprep.mubr.f32.mxu0 0.0
    %641 = vmatmul.mubr.f32.gmra.mxu0 %v296
    %v642 = vpop.f32.mrf.mxu0
    %v643 = vadd.f32 0.0, %v642
    %v644 = vpop.f32.mrf.mxu0
    %645 = vmatprep.mubr.f32.mxu0 0.0
    %646 = vmatmul.mubr.f32.gmra.mxu0 %v299
    %v647 = vpop.f32.mrf.mxu0
    %v648 = vadd.f32 0.0, %v647
    %v649 = vpop.f32.mrf.mxu0
    %650 = vmatprep.mubr.f32.mxu0 0.0
    %651 = vmatmul.mubr.f32.gmra.mxu0 %v302
    %v652 = vpop.f32.mrf.mxu0
    %v653 = vadd.f32 0.0, %v652
    %v654 = vpop.f32.mrf.mxu0
    %655 = vmatprep.mubr.f32.mxu0 0.0
    %656 = vmatmul.mubr.f32.gmra.mxu0 %v305
    %v657 = vpop.f32.mrf.mxu0
    %v658 = vadd.f32 0.0, %v657
    %v659 = vpop.f32.mrf.mxu0
    %660 = vmatprep.mubr.f32.mxu0 0.0
    %661 = vmatmul.mubr.f32.gmra.mxu0 %v308
    %v662 = vpop.f32.mrf.mxu0
    %v663 = vadd.f32 0.0, %v662
    %v664 = vpop.f32.mrf.mxu0
    %665 = vmatprep.mubr.f32.mxu0 0.0
    %666 = vmatmul.mubr.f32.gmra.mxu0 %v311
    %v667 = vpop.f32.mrf.mxu0
    %v668 = vadd.f32 0.0, %v667
    %v669 = vpop.f32.mrf.mxu0
    %670 = vmatprep.mubr.f32.mxu0 0.0
    %671 = vmatmul.mubr.f32.gmra.mxu0 %v314
    %v672 = vpop.f32.mrf.mxu0
    %v673 = vadd.f32 0.0, %v672
    %v674 = vpop.f32.mrf.mxu0
    %675 = vmatprep.mubr.f32.mxu0 0.0
    %676 = vmatmul.mubr.f32.gmra.mxu0 %v317
    %v677 = vpop.f32.mrf.mxu0
    %v678 = vadd.f32 0.0, %v677
    %v679 = vpop.f32.mrf.mxu0
    %680 = vmatprep.mubr.f32.mxu0 0.0
    %681 = vmatmul.mubr.f32.gmra.mxu0 %v320
    %v682 = vpop.f32.mrf.mxu0
    %v683 = vadd.f32 0.0, %v682
    %v684 = vpop.f32.mrf.mxu0
    %685 = vmatprep.mubr.f32.mxu0 0.0
    %686 = vmatmul.mubr.f32.gmra.mxu0 %v323
    %v687 = vpop.f32.mrf.mxu0
    %v688 = vadd.f32 0.0, %v687
    %v689 = vpop.f32.mrf.mxu0
    %690 = vmatprep.mubr.f32.mxu0 0.0
    %691 = vmatmul.mubr.f32.gmra.mxu0 %v326
    %v692 = vpop.f32.mrf.mxu0
    %v693 = vadd.f32 0.0, %v692
    %v694 = vpop.f32.mrf.mxu0
    %695 = vmatprep.mubr.f32.mxu0 0.0
    %696 = vmatmul.mubr.f32.gmra.mxu0 %v329
    %v697 = vpop.f32.mrf.mxu0
    %v698 = vadd.f32 0.0, %v697
    %v699 = vpop.f32.mrf.mxu0
    %700 = vmatprep.mubr.f32.mxu0 0.0
    %701 = vmatmul.mubr.f32.gmra.mxu0 %v332
    %v702 = vpop.f32.mrf.mxu0
    %v703 = vadd.f32 0.0, %v702
    %v704 = vpop.f32.mrf.mxu0
    %705 = vmatprep.mubr.f32.mxu0 0.0
    %706 = vmatmul.mubr.f32.gmra.mxu0 %v335
    %v707 = vpop.f32.mrf.mxu0
    %v708 = vadd.f32 0.0, %v707
    %v709 = vpop.f32.mrf.mxu0
    %710 = vmatprep.mubr.f32.mxu0 0.0
    %711 = vmatmul.mubr.f32.gmra.mxu0 %v338
    %v712 = vpop.f32.mrf.mxu0
    %v713 = vadd.f32 0.0, %v712
    %v714 = vpop.f32.mrf.mxu0
    %715 = vmatprep.mubr.f32.mxu0 0.0
    %716 = vmatmul.mubr.f32.gmra.mxu0 %v341
    %v717 = vpop.f32.mrf.mxu0
    %v718 = vadd.f32 0.0, %v717
    %v719 = vpop.f32.mrf.mxu0
    %720 = vmatprep.mubr.f32.mxu0 0.0
    %721 = vmatmul.mubr.f32.gmra.mxu0 %v344
    %v722 = vpop.f32.mrf.mxu0
    %v723 = vadd.f32 0.0, %v722
    %v724 = vpop.f32.mrf.mxu0
    %725 = vmatprep.mubr.f32.mxu0 0.0
    %726 = vmatmul.mubr.f32.gmra.mxu0 %v347
    %v727 = vpop.f32.mrf.mxu0
    %v728 = vadd.f32 0.0, %v727
    %v729 = vpop.f32.mrf.mxu0
    %730 = vmatprep.mubr.f32.mxu0 0.0
    %731 = vmatmul.mubr.f32.gmra.mxu0 %v350
    %v732 = vpop.f32.mrf.mxu0
    %v733 = vadd.f32 0.0, %v732
    %v734 = vpop.f32.mrf.mxu0
    %735 = vmatprep.mubr.f32.mxu0 0.0
    %736 = vmatmul.mubr.f32.gmra.mxu0 %v353
    %v737 = vpop.f32.mrf.mxu0
    %v738 = vadd.f32 0.0, %v737
    %v739 = vpop.f32.mrf.mxu0
    %740 = vmatprep.mubr.f32.mxu0 0.0
    %741 = vmatmul.mubr.f32.gmra.mxu0 %v356
    %v742 = vpop.f32.mrf.mxu0
    %v743 = vadd.f32 0.0, %v742
    %v744 = vpop.f32.mrf.mxu0
    %745 = vdwg.mxu0
    %746 = vxpose.xlu0.b32.start [1/16] %v428, 128
    %747 = vxpose.xlu0.b32.cont [2/16] %v433, 128
    %748 = vxpose.xlu0.b32.cont [3/16] %v438, 128
    %749 = vxpose.xlu0.b32.cont [4/16] %v443, 128
    %750 = vxpose.xlu0.b32.cont [5/16] %v448, 128
    %751 = vxpose.xlu0.b32.cont [6/16] %v453, 128
    %752 = vxpose.xlu0.b32.cont [7/16] %v458, 128
    %753 = vxpose.xlu0.b32.cont [8/16] %v463, 128
    %754 = vxpose.xlu0.b32.cont [9/16] %v468, 128
    %755 = vxpose.xlu0.b32.cont [10/16] %v473, 128
    %756 = vxpose.xlu0.b32.cont [11/16] %v478, 128
    %757 = vxpose.xlu0.b32.cont [12/16] %v483, 128
    %758 = vxpose.xlu0.b32.cont [13/16] %v488, 128
    %759 = vxpose.xlu0.b32.cont [14/16] %v493, 128
    %760 = vxpose.xlu0.b32.cont [15/16] %v498, 128
    %761 = vxpose.xlu0.b32.end [16/16] %v503, 128
    %v762 = vpop.trf.xlu0
    %v763 = vpop.trf.xlu0
    %v764 = vpop.trf.xlu0
    %v765 = vpop.trf.xlu0
    %v766 = vpop.trf.xlu0
    %v767 = vpop.trf.xlu0
    %v768 = vpop.trf.xlu0
    %v769 = vpop.trf.xlu0
    %v770 = vpop.trf.xlu0
    %v771 = vpop.trf.xlu0
    %v772 = vpop.trf.xlu0
    %v773 = vpop.trf.xlu0
    %v774 = vpop.trf.xlu0
    %v775 = vpop.trf.xlu0
    %v776 = vpop.trf.xlu0
    %v777 = vpop.trf.xlu0
    %778 = vxpose.xlu0.b32.start [1/16] %v508, 128
    %779 = vxpose.xlu0.b32.cont [2/16] %v513, 128
    %780 = vxpose.xlu0.b32.cont [3/16] %v518, 128
    %781 = vxpose.xlu0.b32.cont [4/16] %v523, 128
    %782 = vxpose.xlu0.b32.cont [5/16] %v528, 128
    %783 = vxpose.xlu0.b32.cont [6/16] %v533, 128
    %784 = vxpose.xlu0.b32.cont [7/16] %v538, 128
    %785 = vxpose.xlu0.b32.cont [8/16] %v543, 128
    %786 = vxpose.xlu0.b32.cont [9/16] %v548, 128
    %787 = vxpose.xlu0.b32.cont [10/16] %v553, 128
    %788 = vxpose.xlu0.b32.cont [11/16] %v558, 128
    %789 = vxpose.xlu0.b32.cont [12/16] %v563, 128
    %790 = vxpose.xlu0.b32.cont [13/16] %v568, 128
    %791 = vxpose.xlu0.b32.cont [14/16] %v573, 128
    %792 = vxpose.xlu0.b32.cont [15/16] %v578, 128
    %793 = vxpose.xlu0.b32.end [16/16] %v583, 128
    %v794 = vpop.trf.xlu0
    %v795 = vpop.trf.xlu0
    %v796 = vpop.trf.xlu0
    %v797 = vpop.trf.xlu0
    %v798 = vpop.trf.xlu0
    %v799 = vpop.trf.xlu0
    %v800 = vpop.trf.xlu0
    %v801 = vpop.trf.xlu0
    %v802 = vpop.trf.xlu0
    %v803 = vpop.trf.xlu0
    %v804 = vpop.trf.xlu0
    %v805 = vpop.trf.xlu0
    %v806 = vpop.trf.xlu0
    %v807 = vpop.trf.xlu0
    %v808 = vpop.trf.xlu0
    %v809 = vpop.trf.xlu0
    %810 = vxpose.xlu0.b32.start [1/16] %v588, 128
    %811 = vxpose.xlu0.b32.cont [2/16] %v593, 128
    %812 = vxpose.xlu0.b32.cont [3/16] %v598, 128
    %813 = vxpose.xlu0.b32.cont [4/16] %v603, 128
    %814 = vxpose.xlu0.b32.cont [5/16] %v608, 128
    %815 = vxpose.xlu0.b32.cont [6/16] %v613, 128
    %816 = vxpose.xlu0.b32.cont [7/16] %v618, 128
    %817 = vxpose.xlu0.b32.cont [8/16] %v623, 128
    %818 = vxpose.xlu0.b32.cont [9/16] %v628, 128
    %819 = vxpose.xlu0.b32.cont [10/16] %v633, 128
    %820 = vxpose.xlu0.b32.cont [11/16] %v638, 128
    %821 = vxpose.xlu0.b32.cont [12/16] %v643, 128
    %822 = vxpose.xlu0.b32.cont [13/16] %v648, 128
    %823 = vxpose.xlu0.b32.cont [14/16] %v653, 128
    %824 = vxpose.xlu0.b32.cont [15/16] %v658, 128
    %825 = vxpose.xlu0.b32.end [16/16] %v663, 128
    %v826 = vpop.trf.xlu0
    %v827 = vpop.trf.xlu0
    %v828 = vpop.trf.xlu0
    %v829 = vpop.trf.xlu0
    %v830 = vpop.trf.xlu0
    %v831 = vpop.trf.xlu0
    %v832 = vpop.trf.xlu0
    %v833 = vpop.trf.xlu0
    %v834 = vpop.trf.xlu0
    %v835 = vpop.trf.xlu0
    %v836 = vpop.trf.xlu0
    %v837 = vpop.trf.xlu0
    %v838 = vpop.trf.xlu0
    %v839 = vpop.trf.xlu0
    %v840 = vpop.trf.xlu0
    %v841 = vpop.trf.xlu0
    %842 = vxpose.xlu0.b32.start [1/16] %v668, 128
    %843 = vxpose.xlu0.b32.cont [2/16] %v673, 128
    %844 = vxpose.xlu0.b32.cont [3/16] %v678, 128
    %845 = vxpose.xlu0.b32.cont [4/16] %v683, 128
    %846 = vxpose.xlu0.b32.cont [5/16] %v688, 128
    %847 = vxpose.xlu0.b32.cont [6/16] %v693, 128
    %848 = vxpose.xlu0.b32.cont [7/16] %v698, 128
    %849 = vxpose.xlu0.b32.cont [8/16] %v703, 128
    %850 = vxpose.xlu0.b32.cont [9/16] %v708, 128
    %851 = vxpose.xlu0.b32.cont [10/16] %v713, 128
    %852 = vxpose.xlu0.b32.cont [11/16] %v718, 128
    %853 = vxpose.xlu0.b32.cont [12/16] %v723, 128
    %854 = vxpose.xlu0.b32.cont [13/16] %v728, 128
    %855 = vxpose.xlu0.b32.cont [14/16] %v733, 128
    %856 = vxpose.xlu0.b32.cont [15/16] %v738, 128
    %857 = vxpose.xlu0.b32.end [16/16] %v743, 128
    %v858 = vpop.trf.xlu0
    %v859 = vpop.trf.xlu0
    %v860 = vpop.trf.xlu0
    %v861 = vpop.trf.xlu0
    %v862 = vpop.trf.xlu0
    %v863 = vpop.trf.xlu0
    %v864 = vpop.trf.xlu0
    %v865 = vpop.trf.xlu0
    %v866 = vpop.trf.xlu0
    %v867 = vpop.trf.xlu0
    %v868 = vpop.trf.xlu0
    %v869 = vpop.trf.xlu0
    %v870 = vpop.trf.xlu0
    %v871 = vpop.trf.xlu0
    %v872 = vpop.trf.xlu0
    %v873 = vpop.trf.xlu0
    %v874 = vadd.f32 %v762, %v826
    %v875 = vadd.f32 %v794, %v858
    %v876 = vmul.f32 %v762, %v762
    %v877 = vmul.f32 %v794, %v794
    %v878 = vmul.f32 %v826, %v826
    %v879 = vmul.f32 %v858, %v858
    %v880 = vadd.f32 %v876, %v878
    %v881 = vadd.f32 %v877, %v879
    %v882 = vadd.f32 %v874, %v875
    %883 = vadd.xlane.f32.xlu0 %v882
    %v884 = vpop.xlane.xlu0 %883
    %v885 = vadd.f32 %v880, %v881
    %886 = vadd.xlane.f32.xlu0 %v885
    %v887 = vpop.xlane.xlu0 %886
    %v888 = vrcp.pop 512.0
    %v889 = vmul.f32 %v884, %v888
    %v890 = vmul.f32 %v887, %v888
    %v891 = vmul.f32 %v889, %v889
    %v892 = vsub.f32 %v890, %v891
    %v893 = vld [vmem:[%s2] sm:$0xff]
    %v894 = vadd.f32 %v892, 1e-05
    %v895 = vrsqrt.pop %v894
    %v896 = vmul.f32 %v893, %v895
    %v897 = vld [vmem:[%s3] sm:$0xff]
    %v898 = vmul.f32 %v889, %v896
    %v899 = vsub.f32 %v897, %v898
    %901 = vset.pattern.permute.xlu0 0
    %902 = vperm.xlu0 %901, %v896
    %v903 = vpop.permute.xlu0 %902
    %v905 = vmul.f32 %v762, %v903
    %v906 = vmul.f32 %v794, %v903
    %v907 = vmul.f32 %v826, %v903
    %v908 = vmul.f32 %v858, %v903
    %910 = vset.pattern.permute.xlu0 0
    %911 = vperm.xlu0 %910, %v899
    %v912 = vpop.permute.xlu0 %911
    %v914 = vadd.f32 %v905, %v912
    %v915 = vadd.f32 %v906, %v912
    %v916 = vadd.f32 %v907, %v912
    %v917 = vadd.f32 %v908, %v912
    %v918 = vmax.f32 %v914, 0.0
    %v919 = vmax.f32 %v915, 0.0
    %v920 = vmax.f32 %v916, 0.0
    %v921 = vmax.f32 %v917, 0.0
    %v922 = vadd.f32 %v918, %v32
    %v923 = vadd.f32 %v919, %v33
    %v924 = vadd.f32 %v920, %v34
    %v925 = vadd.f32 %v921, %v35
    %926 = vst [vmem:[#allocation5] sm:$0xff] %v922
    %927 = vst [vmem:[#allocation5 + $0x8] sm:$0xff] %v923
    %928 = vst [vmem:[#allocation5 + $0x10] sm:$0xff] %v924
    %929 = vst [vmem:[#allocation5 + $0x18] sm:$0xff] %v925
    // Predicated region
    $region22: #{tpu_custom_call.1} parent=1 // pred_check
      _
    $region23: #{tpu_custom_call.1} parent=1 // pred_check_branch
      %931 = sbr.rel (0) target = $region25
    $region24: #{tpu_custom_call.1} parent=1 // pred_region
      %s933 = ssub.s32 512, 512
      %934 = vsyncadd [#allocation4], %s933
      %s935 = sshll.u32 [#allocation5], 4
      %s936 = int_to_ptr.vmem [resolvable:$true] %s935
      %941 = dma.vmem_to_hbm [thread:$0]  %s936, 512, %s4, [#allocation4], 256, 256, 16
    $region25: #{tpu_custom_call.1} parent=1 // pred_fallthru
      _
    // Predicated region
    $region26: #{tpu_custom_call.1} parent=1 // pred_check
      _
    $region27: #{tpu_custom_call.1} parent=1 // pred_check_branch
      %943 = sbr.rel (0) target = $region29
    $region28: #{tpu_custom_call.1} parent=1 // pred_region
      %944 = dma.done [#allocation4], 512
    $region29: #{tpu_custom_call.1} parent=1 // pred_fallthru
      _
    %945 = vsyncpa [#allocation3], 1
    %946 = vsyncpa [#allocation4], 1

</llo_original>
